<compile_context>
chip_gen: v7x
topology: tpu7x:2x2x1
jax: 0.10.0
libtpu: 0.0.40
codegen_flags: <defaults>
</compile_context>

<pallas_src>
import jax
import jax.numpy as jnp
import numpy as np
from jax.experimental import pallas as pl
from jax.experimental.pallas import tpu as pltpu

# Only bother splitting the DMA into chunks (for cross-TC sharding on v7x)
# when the array is at least this big; below that a single descriptor wins.
_CHUNK_THRESHOLD_BYTES = 16 * 1024 * 1024


def _whole_copy_kernel(x_hbm, o_hbm, sem):
    # One HBM -> HBM DMA over the entire array. No VMEM staging, no vreg copy.
    cp = pltpu.make_async_copy(x_hbm, o_hbm, sem)
    cp.start()
    cp.wait()


def _make_chunked_copy_kernel(chunk_rows):
    def kernel(x_hbm, o_hbm, sem):
        i = pl.program_id(0)
        start = pl.multiple_of(i * chunk_rows, chunk_rows)
        cp = pltpu.make_async_copy(
            x_hbm.at[pl.ds(start, chunk_rows)],
            o_hbm.at[pl.ds(start, chunk_rows)],
            sem,
        )
        cp.start()
        cp.wait()

    return kernel


def identity(x: jax.Array, *, donated: bool = False) -> jax.Array:
    """Pallas implementation of Identity.forward(input) -> input.

    If `donated=True` (caller hands over its buffer), this is a true no-op.
    Otherwise a fresh output buffer is produced via a direct HBM->HBM DMA.
    """
    if donated:
        return x  # zero-cost path: output buffer IS the input buffer
    if x.size == 0 or x.ndim == 0:
        return x  # degenerate shapes: plain identity, nothing to copy

    nbytes = x.size * jnp.dtype(x.dtype).itemsize
    cost = pl.CostEstimate(flops=0, transcendentals=0, bytes_accessed=2 * nbytes)
    hbm_spec = pl.BlockSpec(memory_space=pl.ANY)
    out_shape = jax.ShapeDtypeStruct(x.shape, x.dtype)

    # Decide how many leading-axis chunks to issue. >1 only for big arrays
    # whose leading dim divides cleanly; lets v7x shard DMA across both TCs.
    n_chunks = 1
    if nbytes >= _CHUNK_THRESHOLD_BYTES:
        lead = x.shape[0]
        for c in (8, 4, 2):
            if lead % c == 0:
                n_chunks = c
                break

    if n_chunks == 1:
        return pl.pallas_call(
            _whole_copy_kernel,
            out_shape=out_shape,
            in_specs=[hbm_spec],
            out_specs=hbm_spec,
            scratch_shapes=[pltpu.SemaphoreType.DMA],
            cost_estimate=cost,
        )(x)

    chunk_rows = x.shape[0] // n_chunks
    return pl.pallas_call(
        _make_chunked_copy_kernel(chunk_rows),
        out_shape=out_shape,
        grid=(n_chunks,),
        in_specs=[hbm_spec],
        out_specs=hbm_spec,
        scratch_shapes=[pltpu.SemaphoreType.DMA],
        cost_estimate=cost,
        compiler_params=pltpu.CompilerParams(
            dimension_semantics=("parallel",)),
    )(x)


if __name__ == "__main__":
    key = jax.random.PRNGKey(0)
    # Small NCHW feature map consistent with Identity inside a ResNet.
    x = jax.random.normal(key, (2, 4, 16, 16), dtype=jnp.float32)

    # Host snapshot before the call so the check is independent of buffer reuse.
    x_host = np.asarray(x)

    # Non-donated path: real HBM->HBM DMA copy through the Pallas kernel.
    y = identity(x)
    jax.block_until_ready(y)
    assert y.shape == x.shape and y.dtype == x.dtype
    assert np.array_equal(np.asarray(y), x_host)

    # Donated path: Identity is a pure no-op (same array object, no copy).
    y_donated = identity(x, donated=True)
    assert y_donated is x

    print("KERNEL_OK")
</pallas_src>

<mosaic_0001>
module attributes {stable_mosaic.version = 11 : i64} {
  func.func @_whole_copy_kernel(%arg0: memref<2x4x16x16xf32, #tpu.memory_space<any>>, %arg1: memref<2x4x16x16xf32, #tpu.memory_space<any>>, %arg2: memref<!tpu.dma_semaphore, #tpu.memory_space<semaphore_mem>>) attributes {dimension_semantics = [], scalar_prefetch = 0 : i64, scratch_operands = 1 : i64, tpu.core_type = #tpu.core_type<tc>} {
    tpu.enqueue_dma source(%arg0 : memref<2x4x16x16xf32, #tpu.memory_space<any>>) target(%arg1 : memref<2x4x16x16xf32, #tpu.memory_space<any>>) target_semaphore(%arg2 : memref<!tpu.dma_semaphore, #tpu.memory_space<semaphore_mem>>)
    tpu.wait_dma2 semaphore(%arg2 : memref<!tpu.dma_semaphore, #tpu.memory_space<semaphore_mem>>) src(%arg0 : memref<2x4x16x16xf32, #tpu.memory_space<any>>) dst(%arg1 : memref<2x4x16x16xf32, #tpu.memory_space<any>>)
    return
  }
}

</mosaic_0001>

<llo_original>
// kernel: tpu_custom_call.1
$region0: #{tpu_custom_call.1}
  #allocation0 [shape = 'u32[]', space=smem, size = 0x4, offset = 0x4, fixed_abs, tag = 'smem constant byte address 0x4 - core index']
  #allocation1 [shape = 'u32[144,128]{1,0:T(1,128)}', space=vmem, size = 0x12000, scoped, tag = 'internal scratch']
  #allocation2 [shape = 's32[1]{0}', space=sflag, size = 0x4, scoped, tag = 'scratch operand']
  #allocation3 [shape = 's32[]', space=sflag, size = 0x4, offset = 0, fixed_abs, tag = 'sflag constant byte address 0x0 - dummy sync flag']
  #allocation4 [shape = 'u32[0]{0}', space=smem, size = 0, offset = 0, fixed_abs, tag = 'smem constant byte address 0x0 - null']
  %s0 = inlined_call_operand.hbm [shape: f32[2,4,16,16], index: 0, kind: input, shape index: {}]
  %s1 = inlined_call_operand.hbm [shape: f32[2,4,16,16], index: 1, kind: output, shape index: {}]
  %s2 = sld [smem:[#allocation0]]
  $region2: #{tpu_custom_call.1} parent=0
    _
  %s4 = ssub.s32 1, %s2
  %s5 = scalar_select 0, %s4, %s2
  %s7 = sshll.u32 1, 14
  %s8 = sxor.u32 4294967295, %s7
  %s11 = sshll.u32 3, 24
  %s12 = sxor.u32 4294967295, %s11
  %s13 = sand.u32 0, %s12
  %s15 = sor.u32 %s13, 0
  %18 = dma.general %s0, 2048, %s1, [#allocation2], [#allocation3], [#allocation4], %s15, 0
  %s19 = smul.u32 2, 4
  %s20 = smul.u32 %s19, 16
  %s21 = smul.u32 %s20, 1
  %s22 = sshll.u32 %s21, 4
  %23 = dma.done [#allocation2], %s22
  %24 = vsyncmov [#allocation2]
  %s25 = vpop.sfrf %24
  %p26 = scmp.eq.s32.totalorder %s25, 0
  %p27 = pneg %p26
  %29 = shalt.err (%p27)

</llo_original>
